<compile_context>
chip_gen: v5e
topology: v5e:2x2
jax: 0.10.0
libtpu: 0.0.40
codegen_flags: <defaults>
</compile_context>

<pallas_src>
import jax
import jax.numpy as jnp
from jax.experimental import pallas as pl
from jax.experimental.pallas import tpu as pltpu

# ---------------- model hyper-parameters (small, deterministic) ----------------
VOCAB = 50
BATCH = 2
SEQ = 8
HIDDEN = 32          # neck_width
N_LORAS = 2
LORA_RANK = 8
LORA_ALPHA = 8
LORA_SCALING = LORA_ALPHA / LORA_RANK
NUM_LABELS = 2
MULT_STD = 0.0

TOKENS = BATCH * SEQ                      # T
WIDE = HIDDEN + N_LORAS * LORA_RANK       # width of the fused [W0^T | A_0^T | A_1^T] projection

# ---------------- packed weight-slab layout (ONE VMEM input DMA) ----------------
# Every block starts on an 8-row (sublane-tile) boundary and at lane 0.
EMB_ROW = 0            # emb @ [W0^T | A_0^T | A_1^T]          : (VOCAB, WIDE)
BT_ROW = 56            # [B_0^T ; B_1^T]                        : (N_LORAS*LORA_RANK, HIDDEN)
WPT_ROW = 72           # pooler dense weight, transposed        : (HIDDEN, HIDDEN)
WCT_ROW = 104          # classification head, transposed        : (HIDDEN, NUM_LABELS)
BP_ROW = 136           # pooler bias                            : (1, HIDDEN)
BC_ROW = 144           # head bias                              : (1, NUM_LABELS)
WSLAB_ROWS = 152
WSLAB_COLS = 128

# ---------------- packed output-slab layout (ONE lane-dense VMEM output DMA) -----
ROW_COMB = 0                               # rows [0, T): comb           (lanes 0..H-1)
ROW_ACTS = TOKENS                          # rows [T, T+n*B): acts (lanes 0..H-1) | shifts (lanes H..2H-1)
ROW_LOGITS = TOKENS + N_LORAS * BATCH      # rows [.., ..+B): logits     (lanes 0..L-1)
ROW_LOSS = ROW_LOGITS + BATCH              # single row: loss at lane 0
OUT_ROWS = 24                              # padded to a sublane-tile multiple


# ---------------- Fused kernel: embed + LoRA forward + combine + classifier + CE --
def fused_kernel(ints_ref, flts_ref, wslab_ref, out_ref):
    f32 = jnp.float32
    H, r, n, L = HIDDEN, LORA_RANK, N_LORAS, NUM_LABELS
    T, B, S = TOKENS, BATCH, SEQ
    TIN = T + B                                    # all tokens + the B CLS tokens duplicated

    # ---- fused embedding gather + attention-mask: masked one-hot over the vocab ----
    # Row t < T selects token t scaled by its mask; rows T..T+B-1 re-select each sequence's
    # CLS token so the CLS projections fall out of the same MXU push (no selection matmul).
    row = jax.lax.broadcasted_iota(jnp.int32, (TIN, VOCAB), 0)
    col = jax.lax.broadcasted_iota(jnp.int32, (TIN, VOCAB), 1)
    onehot = jnp.zeros((TIN, VOCAB), f32)
    for t in range(T):
        onehot = jnp.where((row == t) & (col == ints_ref[t]), flts_ref[t], onehot)
    for b in range(B):
        cls = b * S
        onehot = jnp.where((row == T + b) & (col == ints_ref[cls]), flts_ref[cls], onehot)

    # ---- MXU push 1: frozen base projection AND every adapter's A-projection --------
    emb_big = wslab_ref[EMB_ROW:EMB_ROW + VOCAB, 0:WIDE]               # emb @ [W0^T | A^T..]
    xw = jnp.dot(onehot, emb_big, preferred_element_type=f32)          # (T+B, H + n*r)
    base_all = xw[:, :H]                                               # frozen-base output
    xa_all = xw[:, H:]                                                 # adapter A-projections
    base, base_cls = base_all[:T], base_all[T:]
    xa, xa_cls = xa_all[:T], xa_all[T:]

    # get_averaged_coefs (learnable) live in SMEM; coefs_i * scaling folded into a lane vector.
    coefs = [flts_ref[T + i] for i in range(n)]
    coefs_sum = coefs[0]
    for i in range(1, n):
        coefs_sum = coefs_sum + coefs[i]
    lane = jax.lax.broadcasted_iota(jnp.int32, (1, n * r), 1)
    blks = [(lane >= i * r) & (lane < (i + 1) * r) for i in range(n)]
    cvec = jnp.zeros((1, n * r), f32)
    for i in range(n):
        cvec = jnp.where(blks[i], coefs[i] * LORA_SCALING, cvec)

    # ---- MXU push 2: weighted Δ-sum over all tokens AND per-adapter CLS shifts -------
    op_rows = [xa * cvec]                                              # -> Σ coefs_i·scal·Δ_i
    for i in range(n):
        op_rows.append(jnp.where(blks[i], xa_cls * LORA_SCALING, 0.0)) # -> scal·Δ_i @ CLS
    op = jnp.concatenate(op_rows, axis=0)                              # (T + n*B, n*r)
    bt = wslab_ref[BT_ROW:BT_ROW + n * r, 0:H]                         # [B_0^T ; B_1^T]
    delta = jnp.dot(op, bt, preferred_element_type=f32)                # (T + n*B, H)

    # linear_combination_of_activations:
    #   comb = Σ_i coefs_i·(base + scaling·Δ_i) = (Σ coefs)·base + Σ coefs_i·scaling·Δ_i
    comb = coefs_sum * base + delta[:T]                                # (T, H)
    shifts = [delta[T + i * B: T + (i + 1) * B] for i in range(n)]     # act_i - baseline @ CLS
    acts = [base_cls + shifts[i] for i in range(n)]                    # adapter-i CLS activations
    comb_cls = coefs_sum * base_cls
    for i in range(n):
        comb_cls = comb_cls + coefs[i] * shifts[i]                     # CLS rows of comb

    # ---- classifier = Sequential(pooler, head): dense + tanh on CLS, then linear ----
    wpt = wslab_ref[WPT_ROW:WPT_ROW + H, 0:H]
    bp = wslab_ref[BP_ROW:BP_ROW + 1, 0:H]
    wct = wslab_ref[WCT_ROW:WCT_ROW + H, 0:L]
    bc = wslab_ref[BC_ROW:BC_ROW + 1, 0:L]
    pooled = jnp.tanh(jnp.dot(comb_cls, wpt, preferred_element_type=f32) + bp)   # (B, H)
    logits = jnp.dot(pooled, wct, preferred_element_type=f32) + bc               # (B, L)

    # ---- cross-entropy(logits, labels), mean over batch (matches F.cross_entropy) ----
    m = jnp.max(logits, axis=-1, keepdims=True)
    lse = m + jnp.log(jnp.sum(jnp.exp(logits - m), axis=-1, keepdims=True))      # (B, 1)
    rl = jax.lax.broadcasted_iota(jnp.int32, (B, L), 0)
    cl = jax.lax.broadcasted_iota(jnp.int32, (B, L), 1)
    one_hot = jnp.zeros((B, L), f32)
    for b in range(B):
        one_hot = jnp.where((rl == b) & (cl == ints_ref[T + b]), 1.0, one_hot)
    tgt = jnp.sum(one_hot * logits, axis=-1, keepdims=True)                      # (B, 1)
    loss = jnp.sum(lse - tgt, axis=0, keepdims=True) / B                         # (1, 1)

    # ---- single lane-dense output slab: one unmasked full-tile store, one output DMA ----
    acts2 = jnp.concatenate(acts, axis=0)                              # (n*B, H)
    shifts2 = jnp.concatenate(shifts, axis=0)                          # (n*B, H)
    blk_comb = jnp.concatenate([comb, jnp.zeros((T, 128 - H), f32)], axis=1)
    blk_cls = jnp.concatenate([acts2, shifts2, jnp.zeros((n * B, 128 - 2 * H), f32)], axis=1)
    blk_log = jnp.concatenate([logits, jnp.zeros((B, 128 - L), f32)], axis=1)
    blk_loss = jnp.concatenate([loss, jnp.zeros((1, 127), f32)], axis=1)
    pad = jnp.zeros((OUT_ROWS - (T + n * B + B + 1), 128), f32)
    out_ref[...] = jnp.concatenate([blk_comb, blk_cls, blk_log, blk_loss, pad], axis=0)


def run_fused(ints, flts, wslab):
    smem = pl.BlockSpec(memory_space=pltpu.MemorySpace.SMEM)
    vmem = pl.BlockSpec(memory_space=pltpu.MemorySpace.VMEM)
    return pl.pallas_call(
        fused_kernel,
        out_shape=jax.ShapeDtypeStruct((OUT_ROWS, 128), jnp.float32),
        in_specs=[smem, smem, vmem],
        out_specs=vmem,
    )(ints, flts, wslab)


# ---------------- Parameter init (deterministic, synthetic, pre-packed weights) ----
def init_params(key):
    ks = jax.random.split(key, 6)
    raw = {
        "emb": jax.random.normal(ks[0], (VOCAB, HIDDEN), jnp.float32) * 0.02,
        "w0": jax.random.normal(ks[1], (HIDDEN, HIDDEN), jnp.float32) * 0.05,       # frozen base
        "lora_A": jax.random.normal(ks[2], (N_LORAS, LORA_RANK, HIDDEN), jnp.float32) * 0.1,
        "lora_B": jax.random.normal(ks[3], (N_LORAS, HIDDEN, LORA_RANK), jnp.float32) * 0.1,
        "pooler_w": jax.random.normal(ks[4], (HIDDEN, HIDDEN), jnp.float32) * 0.05,
        "pooler_b": jnp.zeros((HIDDEN,), jnp.float32),
        "cls_w": jax.random.normal(ks[5], (NUM_LABELS, HIDDEN), jnp.float32) * 0.05,
        "cls_b": jnp.zeros((NUM_LABELS,), jnp.float32),
    }

    # Pre-pack (once, at init) into one lane-dense VMEM slab -> single input DMA per forward.
    # The frozen embedding is folded through the fused projection: emb @ [W0^T | A_0^T | A_1^T].
    w_big = jnp.concatenate([raw["w0"].T] + [raw["lora_A"][i].T for i in range(N_LORAS)], axis=1)
    emb_big = raw["emb"] @ w_big                                                   # (V, WIDE)
    bt_flat = jnp.concatenate([raw["lora_B"][i].T for i in range(N_LORAS)], axis=0)

    wslab = jnp.zeros((WSLAB_ROWS, WSLAB_COLS), jnp.float32)
    wslab = wslab.at[EMB_ROW:EMB_ROW + VOCAB, :WIDE].set(emb_big)
    wslab = wslab.at[BT_ROW:BT_ROW + N_LORAS * LORA_RANK, :HIDDEN].set(bt_flat)
    wslab = wslab.at[WPT_ROW:WPT_ROW + HIDDEN, :HIDDEN].set(raw["pooler_w"].T)
    wslab = wslab.at[WCT_ROW:WCT_ROW + HIDDEN, :NUM_LABELS].set(raw["cls_w"].T)
    wslab = wslab.at[BP_ROW, :HIDDEN].set(raw["pooler_b"])
    wslab = wslab.at[BC_ROW, :NUM_LABELS].set(raw["cls_b"])

    # get_averaged_coefs: ones(n)/n * 10**(mult_std/2)  (learnable, folded in-kernel)
    coefs = jnp.ones((N_LORAS,), jnp.float32) / N_LORAS * (10.0 ** (MULT_STD / 2))
    params = {"wslab": wslab, "coefs": coefs}
    return params, raw


# ---------------- Forward pass (eval-mode semantics of ModelWithMultipleLoras) ------
@jax.jit
def model_with_multiple_loras_forward(params, input_ids, attention_mask, labels):
    # Per-call scalars -> two tiny SMEM vectors (token ids + labels ; mask + coefs).
    ints = jnp.concatenate([input_ids.reshape(-1).astype(jnp.int32),
                            labels.reshape(-1).astype(jnp.int32)])
    flts = jnp.concatenate([attention_mask.reshape(-1).astype(jnp.float32),
                            params["coefs"].astype(jnp.float32)])
    slab = run_fused(ints, flts, params["wslab"])

    comb = slab[ROW_COMB:ROW_COMB + TOKENS, :HIDDEN].reshape(BATCH, SEQ, HIDDEN)
    acts = slab[ROW_ACTS:ROW_ACTS + N_LORAS * BATCH, :HIDDEN].reshape(N_LORAS, BATCH, HIDDEN)
    shifts = slab[ROW_ACTS:ROW_ACTS + N_LORAS * BATCH,
                  HIDDEN:2 * HIDDEN].reshape(N_LORAS, BATCH, HIDDEN)
    logits = slab[ROW_LOGITS:ROW_LOGITS + BATCH, :NUM_LABELS]
    loss = slab[ROW_LOSS, 0]

    different_loras_activations = [acts[i] for i in range(N_LORAS)]
    different_loras_shifts = [shifts[i] for i in range(N_LORAS)]
    return loss, logits, different_loras_activations, different_loras_shifts, comb


# ---------------- Pure-JAX reference of the module's eval-mode forward --------------
def reference_forward(raw, coefs, input_ids, attention_mask, labels):
    x = raw["emb"][input_ids] * attention_mask[..., None].astype(jnp.float32)   # (B,S,H)
    base = x @ raw["w0"].T
    acts_full = [base + LORA_SCALING * ((x @ raw["lora_A"][i].T) @ raw["lora_B"][i].T)
                 for i in range(N_LORAS)]
    comb = sum(coefs[i] * acts_full[i] for i in range(N_LORAS))
    pooled = jnp.tanh(comb[:, 0] @ raw["pooler_w"].T + raw["pooler_b"])
    logits = pooled @ raw["cls_w"].T + raw["cls_b"]
    m = jnp.max(logits, axis=-1)
    lse = m + jnp.log(jnp.sum(jnp.exp(logits - m[:, None]), axis=-1))
    tgt = jnp.take_along_axis(logits, labels[:, None], axis=-1)[:, 0]
    loss = jnp.mean(lse - tgt)
    acts_cls = [a[:, 0] for a in acts_full]
    shifts = [a - base[:, 0] for a in acts_cls]
    return loss, logits, acts_cls, shifts, comb


if __name__ == "__main__":
    key = jax.random.PRNGKey(0)
    kp, ki, kl = jax.random.split(key, 3)
    params, raw = init_params(kp)

    input_ids = jax.random.randint(ki, (BATCH, SEQ), 0, VOCAB, dtype=jnp.int32)
    attention_mask = jnp.ones((BATCH, SEQ), jnp.int32)
    labels = jax.random.randint(kl, (BATCH,), 0, NUM_LABELS, dtype=jnp.int32)

    out = model_with_multiple_loras_forward(params, input_ids, attention_mask, labels)
    out = jax.block_until_ready(out)
    loss, logits, acts_list, shifts_list, combined = out

    assert logits.shape == (BATCH, NUM_LABELS)
    assert len(acts_list) == N_LORAS and acts_list[0].shape == (BATCH, HIDDEN)
    assert len(shifts_list) == N_LORAS and shifts_list[0].shape == (BATCH, HIDDEN)
    assert combined.shape == (BATCH, SEQ, HIDDEN)
    assert bool(jnp.isfinite(loss))

    # numerical check against the pure-JAX reference
    r_loss, r_logits, r_acts, r_shifts, r_comb = reference_forward(
        raw, params["coefs"], input_ids, attention_mask, labels)
    tol = dict(rtol=1e-4, atol=1e-5)
    assert jnp.allclose(loss, r_loss, **tol)
    assert jnp.allclose(logits, r_logits, **tol)
    assert jnp.allclose(combined, r_comb, **tol)
    for i in range(N_LORAS):
        assert jnp.allclose(acts_list[i], r_acts[i], **tol)
        assert jnp.allclose(shifts_list[i], r_shifts[i], **tol)

    print("KERNEL_OK")
</pallas_src>

<mosaic_0001>
module attributes {stable_mosaic.version = 11 : i64} {
  func.func @fused_kernel(%arg0: memref<18xi32, #tpu.memory_space<smem>>, %arg1: memref<18xf32, #tpu.memory_space<smem>>, %arg2: memref<152x128xf32, #tpu.memory_space<vmem>>, %arg3: memref<24x128xf32, #tpu.memory_space<vmem>>) attributes {dimension_semantics = [], scalar_prefetch = 0 : i64, scratch_operands = 0 : i64, tpu.core_type = #tpu.core_type<tc>} {
    %0 = tpu.iota {dimensions = array<i32: 0>} : vector<18x50xi32>
    %1 = tpu.iota {dimensions = array<i32: 1>} : vector<18x50xi32>
    %cst = arith.constant 0.000000e+00 : f32
    %2 = vector.broadcast %cst : f32 to vector<18x50xf32>
    %c0_i32 = arith.constant 0 : i32
    %3 = vector.broadcast %c0_i32 : i32 to vector<18x50xi32>
    %4 = arith.cmpi eq, %0, %3 : vector<18x50xi32>
    %c0 = arith.constant 0 : index
    %5 = memref.load %arg0[%c0] : memref<18xi32, #tpu.memory_space<smem>>
    %6 = vector.broadcast %5 : i32 to vector<18x50xi32>
    %7 = arith.cmpi eq, %1, %6 : vector<18x50xi32>
    %8 = arith.andi %4, %7 : vector<18x50xi1>
    %c0_0 = arith.constant 0 : index
    %9 = memref.load %arg1[%c0_0] : memref<18xf32, #tpu.memory_space<smem>>
    %10 = vector.broadcast %9 : f32 to vector<18x50xf32>
    %11 = arith.select %8, %10, %2 : vector<18x50xi1>, vector<18x50xf32>
    %c1_i32 = arith.constant 1 : i32
    %12 = vector.broadcast %c1_i32 : i32 to vector<18x50xi32>
    %13 = arith.cmpi eq, %0, %12 : vector<18x50xi32>
    %c1 = arith.constant 1 : index
    %14 = memref.load %arg0[%c1] : memref<18xi32, #tpu.memory_space<smem>>
    %15 = vector.broadcast %14 : i32 to vector<18x50xi32>
    %16 = arith.cmpi eq, %1, %15 : vector<18x50xi32>
    %17 = arith.andi %13, %16 : vector<18x50xi1>
    %c1_1 = arith.constant 1 : index
    %18 = memref.load %arg1[%c1_1] : memref<18xf32, #tpu.memory_space<smem>>
    %19 = vector.broadcast %18 : f32 to vector<18x50xf32>
    %20 = arith.select %17, %19, %11 : vector<18x50xi1>, vector<18x50xf32>
    %c2_i32 = arith.constant 2 : i32
    %21 = vector.broadcast %c2_i32 : i32 to vector<18x50xi32>
    %22 = arith.cmpi eq, %0, %21 : vector<18x50xi32>
    %c2 = arith.constant 2 : index
    %23 = memref.load %arg0[%c2] : memref<18xi32, #tpu.memory_space<smem>>
    %24 = vector.broadcast %23 : i32 to vector<18x50xi32>
    %25 = arith.cmpi eq, %1, %24 : vector<18x50xi32>
    %26 = arith.andi %22, %25 : vector<18x50xi1>
    %c2_2 = arith.constant 2 : index
    %27 = memref.load %arg1[%c2_2] : memref<18xf32, #tpu.memory_space<smem>>
    %28 = vector.broadcast %27 : f32 to vector<18x50xf32>
    %29 = arith.select %26, %28, %20 : vector<18x50xi1>, vector<18x50xf32>
    %c3_i32 = arith.constant 3 : i32
    %30 = vector.broadcast %c3_i32 : i32 to vector<18x50xi32>
    %31 = arith.cmpi eq, %0, %30 : vector<18x50xi32>
    %c3 = arith.constant 3 : index
    %32 = memref.load %arg0[%c3] : memref<18xi32, #tpu.memory_space<smem>>
    %33 = vector.broadcast %32 : i32 to vector<18x50xi32>
    %34 = arith.cmpi eq, %1, %33 : vector<18x50xi32>
    %35 = arith.andi %31, %34 : vector<18x50xi1>
    %c3_3 = arith.constant 3 : index
    %36 = memref.load %arg1[%c3_3] : memref<18xf32, #tpu.memory_space<smem>>
    %37 = vector.broadcast %36 : f32 to vector<18x50xf32>
    %38 = arith.select %35, %37, %29 : vector<18x50xi1>, vector<18x50xf32>
    %c4_i32 = arith.constant 4 : i32
    %39 = vector.broadcast %c4_i32 : i32 to vector<18x50xi32>
    %40 = arith.cmpi eq, %0, %39 : vector<18x50xi32>
    %c4 = arith.constant 4 : index
    %41 = memref.load %arg0[%c4] : memref<18xi32, #tpu.memory_space<smem>>
    %42 = vector.broadcast %41 : i32 to vector<18x50xi32>
    %43 = arith.cmpi eq, %1, %42 : vector<18x50xi32>
    %44 = arith.andi %40, %43 : vector<18x50xi1>
    %c4_4 = arith.constant 4 : index
    %45 = memref.load %arg1[%c4_4] : memref<18xf32, #tpu.memory_space<smem>>
    %46 = vector.broadcast %45 : f32 to vector<18x50xf32>
    %47 = arith.select %44, %46, %38 : vector<18x50xi1>, vector<18x50xf32>
    %c5_i32 = arith.constant 5 : i32
    %48 = vector.broadcast %c5_i32 : i32 to vector<18x50xi32>
    %49 = arith.cmpi eq, %0, %48 : vector<18x50xi32>
    %c5 = arith.constant 5 : index
    %50 = memref.load %arg0[%c5] : memref<18xi32, #tpu.memory_space<smem>>
    %51 = vector.broadcast %50 : i32 to vector<18x50xi32>
    %52 = arith.cmpi eq, %1, %51 : vector<18x50xi32>
    %53 = arith.andi %49, %52 : vector<18x50xi1>
    %c5_5 = arith.constant 5 : index
    %54 = memref.load %arg1[%c5_5] : memref<18xf32, #tpu.memory_space<smem>>
    %55 = vector.broadcast %54 : f32 to vector<18x50xf32>
    %56 = arith.select %53, %55, %47 : vector<18x50xi1>, vector<18x50xf32>
    %c6_i32 = arith.constant 6 : i32
    %57 = vector.broadcast %c6_i32 : i32 to vector<18x50xi32>
    %58 = arith.cmpi eq, %0, %57 : vector<18x50xi32>
    %c6 = arith.constant 6 : index
    %59 = memref.load %arg0[%c6] : memref<18xi32, #tpu.memory_space<smem>>
    %60 = vector.broadcast %59 : i32 to vector<18x50xi32>
    %61 = arith.cmpi eq, %1, %60 : vector<18x50xi32>
    %62 = arith.andi %58, %61 : vector<18x50xi1>
    %c6_6 = arith.constant 6 : index
    %63 = memref.load %arg1[%c6_6] : memref<18xf32, #tpu.memory_space<smem>>
    %64 = vector.broadcast %63 : f32 to vector<18x50xf32>
    %65 = arith.select %62, %64, %56 : vector<18x50xi1>, vector<18x50xf32>
    %c7_i32 = arith.constant 7 : i32
    %66 = vector.broadcast %c7_i32 : i32 to vector<18x50xi32>
    %67 = arith.cmpi eq, %0, %66 : vector<18x50xi32>
    %c7 = arith.constant 7 : index
    %68 = memref.load %arg0[%c7] : memref<18xi32, #tpu.memory_space<smem>>
    %69 = vector.broadcast %68 : i32 to vector<18x50xi32>
    %70 = arith.cmpi eq, %1, %69 : vector<18x50xi32>
    %71 = arith.andi %67, %70 : vector<18x50xi1>
    %c7_7 = arith.constant 7 : index
    %72 = memref.load %arg1[%c7_7] : memref<18xf32, #tpu.memory_space<smem>>
    %73 = vector.broadcast %72 : f32 to vector<18x50xf32>
    %74 = arith.select %71, %73, %65 : vector<18x50xi1>, vector<18x50xf32>
    %c8_i32 = arith.constant 8 : i32
    %75 = vector.broadcast %c8_i32 : i32 to vector<18x50xi32>
    %76 = arith.cmpi eq, %0, %75 : vector<18x50xi32>
    %c8 = arith.constant 8 : index
    %77 = memref.load %arg0[%c8] : memref<18xi32, #tpu.memory_space<smem>>
    %78 = vector.broadcast %77 : i32 to vector<18x50xi32>
    %79 = arith.cmpi eq, %1, %78 : vector<18x50xi32>
    %80 = arith.andi %76, %79 : vector<18x50xi1>
    %c8_8 = arith.constant 8 : index
    %81 = memref.load %arg1[%c8_8] : memref<18xf32, #tpu.memory_space<smem>>
    %82 = vector.broadcast %81 : f32 to vector<18x50xf32>
    %83 = arith.select %80, %82, %74 : vector<18x50xi1>, vector<18x50xf32>
    %c9_i32 = arith.constant 9 : i32
    %84 = vector.broadcast %c9_i32 : i32 to vector<18x50xi32>
    %85 = arith.cmpi eq, %0, %84 : vector<18x50xi32>
    %c9 = arith.constant 9 : index
    %86 = memref.load %arg0[%c9] : memref<18xi32, #tpu.memory_space<smem>>
    %87 = vector.broadcast %86 : i32 to vector<18x50xi32>
    %88 = arith.cmpi eq, %1, %87 : vector<18x50xi32>
    %89 = arith.andi %85, %88 : vector<18x50xi1>
    %c9_9 = arith.constant 9 : index
    %90 = memref.load %arg1[%c9_9] : memref<18xf32, #tpu.memory_space<smem>>
    %91 = vector.broadcast %90 : f32 to vector<18x50xf32>
    %92 = arith.select %89, %91, %83 : vector<18x50xi1>, vector<18x50xf32>
    %c10_i32 = arith.constant 10 : i32
    %93 = vector.broadcast %c10_i32 : i32 to vector<18x50xi32>
    %94 = arith.cmpi eq, %0, %93 : vector<18x50xi32>
    %c10 = arith.constant 10 : index
    %95 = memref.load %arg0[%c10] : memref<18xi32, #tpu.memory_space<smem>>
    %96 = vector.broadcast %95 : i32 to vector<18x50xi32>
    %97 = arith.cmpi eq, %1, %96 : vector<18x50xi32>
    %98 = arith.andi %94, %97 : vector<18x50xi1>
    %c10_10 = arith.constant 10 : index
    %99 = memref.load %arg1[%c10_10] : memref<18xf32, #tpu.memory_space<smem>>
    %100 = vector.broadcast %99 : f32 to vector<18x50xf32>
    %101 = arith.select %98, %100, %92 : vector<18x50xi1>, vector<18x50xf32>
    %c11_i32 = arith.constant 11 : i32
    %102 = vector.broadcast %c11_i32 : i32 to vector<18x50xi32>
    %103 = arith.cmpi eq, %0, %102 : vector<18x50xi32>
    %c11 = arith.constant 11 : index
    %104 = memref.load %arg0[%c11] : memref<18xi32, #tpu.memory_space<smem>>
    %105 = vector.broadcast %104 : i32 to vector<18x50xi32>
    %106 = arith.cmpi eq, %1, %105 : vector<18x50xi32>
    %107 = arith.andi %103, %106 : vector<18x50xi1>
    %c11_11 = arith.constant 11 : index
    %108 = memref.load %arg1[%c11_11] : memref<18xf32, #tpu.memory_space<smem>>
    %109 = vector.broadcast %108 : f32 to vector<18x50xf32>
    %110 = arith.select %107, %109, %101 : vector<18x50xi1>, vector<18x50xf32>
    %c12_i32 = arith.constant 12 : i32
    %111 = vector.broadcast %c12_i32 : i32 to vector<18x50xi32>
    %112 = arith.cmpi eq, %0, %111 : vector<18x50xi32>
    %c12 = arith.constant 12 : index
    %113 = memref.load %arg0[%c12] : memref<18xi32, #tpu.memory_space<smem>>
    %114 = vector.broadcast %113 : i32 to vector<18x50xi32>
    %115 = arith.cmpi eq, %1, %114 : vector<18x50xi32>
    %116 = arith.andi %112, %115 : vector<18x50xi1>
    %c12_12 = arith.constant 12 : index
    %117 = memref.load %arg1[%c12_12] : memref<18xf32, #tpu.memory_space<smem>>
    %118 = vector.broadcast %117 : f32 to vector<18x50xf32>
    %119 = arith.select %116, %118, %110 : vector<18x50xi1>, vector<18x50xf32>
    %c13_i32 = arith.constant 13 : i32
    %120 = vector.broadcast %c13_i32 : i32 to vector<18x50xi32>
    %121 = arith.cmpi eq, %0, %120 : vector<18x50xi32>
    %c13 = arith.constant 13 : index
    %122 = memref.load %arg0[%c13] : memref<18xi32, #tpu.memory_space<smem>>
    %123 = vector.broadcast %122 : i32 to vector<18x50xi32>
    %124 = arith.cmpi eq, %1, %123 : vector<18x50xi32>
    %125 = arith.andi %121, %124 : vector<18x50xi1>
    %c13_13 = arith.constant 13 : index
    %126 = memref.load %arg1[%c13_13] : memref<18xf32, #tpu.memory_space<smem>>
    %127 = vector.broadcast %126 : f32 to vector<18x50xf32>
    %128 = arith.select %125, %127, %119 : vector<18x50xi1>, vector<18x50xf32>
    %c14_i32 = arith.constant 14 : i32
    %129 = vector.broadcast %c14_i32 : i32 to vector<18x50xi32>
    %130 = arith.cmpi eq, %0, %129 : vector<18x50xi32>
    %c14 = arith.constant 14 : index
    %131 = memref.load %arg0[%c14] : memref<18xi32, #tpu.memory_space<smem>>
    %132 = vector.broadcast %131 : i32 to vector<18x50xi32>
    %133 = arith.cmpi eq, %1, %132 : vector<18x50xi32>
    %134 = arith.andi %130, %133 : vector<18x50xi1>
    %c14_14 = arith.constant 14 : index
    %135 = memref.load %arg1[%c14_14] : memref<18xf32, #tpu.memory_space<smem>>
    %136 = vector.broadcast %135 : f32 to vector<18x50xf32>
    %137 = arith.select %134, %136, %128 : vector<18x50xi1>, vector<18x50xf32>
    %c15_i32 = arith.constant 15 : i32
    %138 = vector.broadcast %c15_i32 : i32 to vector<18x50xi32>
    %139 = arith.cmpi eq, %0, %138 : vector<18x50xi32>
    %c15 = arith.constant 15 : index
    %140 = memref.load %arg0[%c15] : memref<18xi32, #tpu.memory_space<smem>>
    %141 = vector.broadcast %140 : i32 to vector<18x50xi32>
    %142 = arith.cmpi eq, %1, %141 : vector<18x50xi32>
    %143 = arith.andi %139, %142 : vector<18x50xi1>
    %c15_15 = arith.constant 15 : index
    %144 = memref.load %arg1[%c15_15] : memref<18xf32, #tpu.memory_space<smem>>
    %145 = vector.broadcast %144 : f32 to vector<18x50xf32>
    %146 = arith.select %143, %145, %137 : vector<18x50xi1>, vector<18x50xf32>
    %c16_i32 = arith.constant 16 : i32
    %147 = vector.broadcast %c16_i32 : i32 to vector<18x50xi32>
    %148 = arith.cmpi eq, %0, %147 : vector<18x50xi32>
    %c0_16 = arith.constant 0 : index
    %149 = memref.load %arg0[%c0_16] : memref<18xi32, #tpu.memory_space<smem>>
    %150 = vector.broadcast %149 : i32 to vector<18x50xi32>
    %151 = arith.cmpi eq, %1, %150 : vector<18x50xi32>
    %152 = arith.andi %148, %151 : vector<18x50xi1>
    %c0_17 = arith.constant 0 : index
    %153 = memref.load %arg1[%c0_17] : memref<18xf32, #tpu.memory_space<smem>>
    %154 = vector.broadcast %153 : f32 to vector<18x50xf32>
    %155 = arith.select %152, %154, %146 : vector<18x50xi1>, vector<18x50xf32>
    %c17_i32 = arith.constant 17 : i32
    %156 = vector.broadcast %c17_i32 : i32 to vector<18x50xi32>
    %157 = arith.cmpi eq, %0, %156 : vector<18x50xi32>
    %c8_18 = arith.constant 8 : index
    %158 = memref.load %arg0[%c8_18] : memref<18xi32, #tpu.memory_space<smem>>
    %159 = vector.broadcast %158 : i32 to vector<18x50xi32>
    %160 = arith.cmpi eq, %1, %159 : vector<18x50xi32>
    %161 = arith.andi %157, %160 : vector<18x50xi1>
    %c8_19 = arith.constant 8 : index
    %162 = memref.load %arg1[%c8_19] : memref<18xf32, #tpu.memory_space<smem>>
    %163 = vector.broadcast %162 : f32 to vector<18x50xf32>
    %164 = arith.select %161, %163, %155 : vector<18x50xi1>, vector<18x50xf32>
    %c0_20 = arith.constant 0 : index
    %c0_21 = arith.constant 0 : index
    %165 = vector.load %arg2[%c0_20, %c0_21] : memref<152x128xf32, #tpu.memory_space<vmem>>, vector<50x48xf32>
    %cst_22 = arith.constant dense<0.000000e+00> : vector<18x48xf32>
    %166 = tpu.matmul %164, %165, %cst_22 {dimension_numbers = #tpu.dot_dimension_numbers<[1], [0], [0], [1], [0, 0, 1, 1], [], []>} : vector<18x50xf32>, vector<50x48xf32>, vector<18x48xf32> -> vector<18x48xf32>
    %167 = vector.extract_strided_slice %166 {offsets = [0, 0], sizes = [18, 32], strides = [1, 1]} : vector<18x48xf32> to vector<18x32xf32>
    %168 = vector.extract_strided_slice %166 {offsets = [0, 32], sizes = [18, 16], strides = [1, 1]} : vector<18x48xf32> to vector<18x16xf32>
    %169 = vector.extract_strided_slice %167 {offsets = [0, 0], sizes = [16, 32], strides = [1, 1]} : vector<18x32xf32> to vector<16x32xf32>
    %170 = vector.extract_strided_slice %167 {offsets = [16, 0], sizes = [2, 32], strides = [1, 1]} : vector<18x32xf32> to vector<2x32xf32>
    %171 = vector.extract_strided_slice %168 {offsets = [0, 0], sizes = [16, 16], strides = [1, 1]} : vector<18x16xf32> to vector<16x16xf32>
    %172 = vector.extract_strided_slice %168 {offsets = [16, 0], sizes = [2, 16], strides = [1, 1]} : vector<18x16xf32> to vector<2x16xf32>
    %c16 = arith.constant 16 : index
    %173 = memref.load %arg1[%c16] : memref<18xf32, #tpu.memory_space<smem>>
    %c17 = arith.constant 17 : index
    %174 = memref.load %arg1[%c17] : memref<18xf32, #tpu.memory_space<smem>>
    %175 = arith.addf %173, %174 : f32
    %176 = tpu.iota {dimensions = array<i32: 1>} : vector<1x16xi32>
    %c0_i32_23 = arith.constant 0 : i32
    %177 = vector.broadcast %c0_i32_23 : i32 to vector<1x16xi32>
    %178 = arith.cmpi sge, %176, %177 : vector<1x16xi32>
    %c8_i32_24 = arith.constant 8 : i32
    %179 = vector.broadcast %c8_i32_24 : i32 to vector<1x16xi32>
    %180 = arith.cmpi slt, %176, %179 : vector<1x16xi32>
    %181 = arith.andi %178, %180 : vector<1x16xi1>
    %c8_i32_25 = arith.constant 8 : i32
    %182 = vector.broadcast %c8_i32_25 : i32 to vector<1x16xi32>
    %183 = arith.cmpi sge, %176, %182 : vector<1x16xi32>
    %c16_i32_26 = arith.constant 16 : i32
    %184 = vector.broadcast %c16_i32_26 : i32 to vector<1x16xi32>
    %185 = arith.cmpi slt, %176, %184 : vector<1x16xi32>
    %186 = arith.andi %183, %185 : vector<1x16xi1>
    %cst_27 = arith.constant 0.000000e+00 : f32
    %187 = vector.broadcast %cst_27 : f32 to vector<1x16xf32>
    %cst_28 = arith.constant 1.000000e+00 : f32
    %188 = arith.mulf %173, %cst_28 : f32
    %189 = vector.broadcast %188 : f32 to vector<1x16xf32>
    %190 = arith.select %181, %189, %187 : vector<1x16xi1>, vector<1x16xf32>
    %cst_29 = arith.constant 1.000000e+00 : f32
    %191 = arith.mulf %174, %cst_29 : f32
    %192 = vector.broadcast %191 : f32 to vector<1x16xf32>
    %193 = arith.select %186, %192, %190 : vector<1x16xi1>, vector<1x16xf32>
    %194 = vector.broadcast %193 : vector<1x16xf32> to vector<16x16xf32>
    %195 = arith.mulf %171, %194 : vector<16x16xf32>
    %cst_30 = arith.constant 1.000000e+00 : f32
    %196 = vector.broadcast %cst_30 : f32 to vector<2x16xf32>
    %197 = arith.mulf %172, %196 : vector<2x16xf32>
    %cst_31 = arith.constant 0.000000e+00 : f32
    %198 = vector.shape_cast %181 : vector<1x16xi1> to vector<1x16xi1>
    %199 = vector.broadcast %198 : vector<1x16xi1> to vector<2x16xi1>
    %200 = vector.broadcast %cst_31 : f32 to vector<2x16xf32>
    %201 = arith.select %199, %197, %200 : vector<2x16xi1>, vector<2x16xf32>
    %cst_32 = arith.constant 1.000000e+00 : f32
    %202 = vector.broadcast %cst_32 : f32 to vector<2x16xf32>
    %203 = arith.mulf %172, %202 : vector<2x16xf32>
    %cst_33 = arith.constant 0.000000e+00 : f32
    %204 = vector.shape_cast %186 : vector<1x16xi1> to vector<1x16xi1>
    %205 = vector.broadcast %204 : vector<1x16xi1> to vector<2x16xi1>
    %206 = vector.broadcast %cst_33 : f32 to vector<2x16xf32>
    %207 = arith.select %205, %203, %206 : vector<2x16xi1>, vector<2x16xf32>
    %208 = tpu.concatenate %195, %201, %207 in 0 : vector<16x16xf32>, vector<2x16xf32>, vector<2x16xf32> -> vector<20x16xf32>
    %c56 = arith.constant 56 : index
    %c0_34 = arith.constant 0 : index
    %209 = vector.load %arg2[%c56, %c0_34] : memref<152x128xf32, #tpu.memory_space<vmem>>, vector<16x32xf32>
    %cst_35 = arith.constant dense<0.000000e+00> : vector<20x32xf32>
    %210 = tpu.matmul %208, %209, %cst_35 {dimension_numbers = #tpu.dot_dimension_numbers<[1], [0], [0], [1], [0, 0, 1, 1], [], []>} : vector<20x16xf32>, vector<16x32xf32>, vector<20x32xf32> -> vector<20x32xf32>
    %211 = vector.broadcast %175 : f32 to vector<16x32xf32>
    %212 = arith.mulf %211, %169 : vector<16x32xf32>
    %213 = vector.extract_strided_slice %210 {offsets = [0, 0], sizes = [16, 32], strides = [1, 1]} : vector<20x32xf32> to vector<16x32xf32>
    %214 = arith.addf %212, %213 : vector<16x32xf32>
    %215 = vector.extract_strided_slice %210 {offsets = [16, 0], sizes = [2, 32], strides = [1, 1]} : vector<20x32xf32> to vector<2x32xf32>
    %216 = vector.extract_strided_slice %210 {offsets = [18, 0], sizes = [2, 32], strides = [1, 1]} : vector<20x32xf32> to vector<2x32xf32>
    %217 = arith.addf %170, %215 : vector<2x32xf32>
    %218 = arith.addf %170, %216 : vector<2x32xf32>
    %219 = vector.broadcast %175 : f32 to vector<2x32xf32>
    %220 = arith.mulf %219, %170 : vector<2x32xf32>
    %221 = vector.broadcast %173 : f32 to vector<2x32xf32>
    %222 = arith.mulf %221, %215 : vector<2x32xf32>
    %223 = arith.addf %220, %222 : vector<2x32xf32>
    %224 = vector.broadcast %174 : f32 to vector<2x32xf32>
    %225 = arith.mulf %224, %216 : vector<2x32xf32>
    %226 = arith.addf %223, %225 : vector<2x32xf32>
    %c72 = arith.constant 72 : index
    %c0_36 = arith.constant 0 : index
    %227 = vector.load %arg2[%c72, %c0_36] : memref<152x128xf32, #tpu.memory_space<vmem>>, vector<32x32xf32>
    %c136 = arith.constant 136 : index
    %c0_37 = arith.constant 0 : index
    %228 = vector.load %arg2[%c136, %c0_37] : memref<152x128xf32, #tpu.memory_space<vmem>>, vector<1x32xf32>
    %c104 = arith.constant 104 : index
    %c0_38 = arith.constant 0 : index
    %229 = vector.load %arg2[%c104, %c0_38] : memref<152x128xf32, #tpu.memory_space<vmem>>, vector<32x2xf32>
    %c144 = arith.constant 144 : index
    %c0_39 = arith.constant 0 : index
    %230 = vector.load %arg2[%c144, %c0_39] : memref<152x128xf32, #tpu.memory_space<vmem>>, vector<1x2xf32>
    %cst_40 = arith.constant dense<0.000000e+00> : vector<2x32xf32>
    %231 = tpu.matmul %226, %227, %cst_40 {dimension_numbers = #tpu.dot_dimension_numbers<[1], [0], [0], [1], [0, 0, 1, 1], [], []>} : vector<2x32xf32>, vector<32x32xf32>, vector<2x32xf32> -> vector<2x32xf32>
    %232 = vector.broadcast %228 : vector<1x32xf32> to vector<2x32xf32>
    %233 = arith.addf %231, %232 : vector<2x32xf32>
    %234 = math.tanh %233 : vector<2x32xf32>
    %cst_41 = arith.constant dense<0.000000e+00> : vector<2x2xf32>
    %235 = tpu.matmul %234, %229, %cst_41 {dimension_numbers = #tpu.dot_dimension_numbers<[1], [0], [0], [1], [0, 0, 1, 1], [], []>} : vector<2x32xf32>, vector<32x2xf32>, vector<2x2xf32> -> vector<2x2xf32>
    %236 = vector.broadcast %230 : vector<1x2xf32> to vector<2x2xf32>
    %237 = arith.addf %235, %236 : vector<2x2xf32>
    %cst_42 = arith.constant dense<0xFF800000> : vector<2xf32>
    %238 = vector.multi_reduction <maximumf>, %237, %cst_42 [1] : vector<2x2xf32> to vector<2xf32>
    %239 = vector.shape_cast %238 : vector<2xf32> to vector<2x1xf32>
    %240 = vector.broadcast %239 : vector<2x1xf32> to vector<2x2xf32>
    %241 = arith.subf %237, %240 : vector<2x2xf32>
    %242 = math.exp %241 : vector<2x2xf32>
    %cst_43 = arith.constant dense<0.000000e+00> : vector<2xf32>
    %243 = vector.multi_reduction <add>, %242, %cst_43 [1] : vector<2x2xf32> to vector<2xf32>
    %244 = vector.shape_cast %243 : vector<2xf32> to vector<2x1xf32>
    %245 = math.log %244 : vector<2x1xf32>
    %246 = arith.addf %239, %245 : vector<2x1xf32>
    %247 = tpu.iota {dimensions = array<i32: 0>} : vector<2x2xi32>
    %248 = tpu.iota {dimensions = array<i32: 1>} : vector<2x2xi32>
    %cst_44 = arith.constant 0.000000e+00 : f32
    %249 = vector.broadcast %cst_44 : f32 to vector<2x2xf32>
    %c0_i32_45 = arith.constant 0 : i32
    %250 = vector.broadcast %c0_i32_45 : i32 to vector<2x2xi32>
    %251 = arith.cmpi eq, %247, %250 : vector<2x2xi32>
    %c16_46 = arith.constant 16 : index
    %252 = memref.load %arg0[%c16_46] : memref<18xi32, #tpu.memory_space<smem>>
    %253 = vector.broadcast %252 : i32 to vector<2x2xi32>
    %254 = arith.cmpi eq, %248, %253 : vector<2x2xi32>
    %255 = arith.andi %251, %254 : vector<2x2xi1>
    %cst_47 = arith.constant 1.000000e+00 : f32
    %256 = vector.broadcast %cst_47 : f32 to vector<2x2xf32>
    %257 = arith.select %255, %256, %249 : vector<2x2xi1>, vector<2x2xf32>
    %c1_i32_48 = arith.constant 1 : i32
    %258 = vector.broadcast %c1_i32_48 : i32 to vector<2x2xi32>
    %259 = arith.cmpi eq, %247, %258 : vector<2x2xi32>
    %c17_49 = arith.constant 17 : index
    %260 = memref.load %arg0[%c17_49] : memref<18xi32, #tpu.memory_space<smem>>
    %261 = vector.broadcast %260 : i32 to vector<2x2xi32>
    %262 = arith.cmpi eq, %248, %261 : vector<2x2xi32>
    %263 = arith.andi %259, %262 : vector<2x2xi1>
    %cst_50 = arith.constant 1.000000e+00 : f32
    %264 = vector.broadcast %cst_50 : f32 to vector<2x2xf32>
    %265 = arith.select %263, %264, %257 : vector<2x2xi1>, vector<2x2xf32>
    %266 = arith.mulf %265, %237 : vector<2x2xf32>
    %cst_51 = arith.constant dense<0.000000e+00> : vector<2xf32>
    %267 = vector.multi_reduction <add>, %266, %cst_51 [1] : vector<2x2xf32> to vector<2xf32>
    %268 = vector.shape_cast %267 : vector<2xf32> to vector<2x1xf32>
    %269 = arith.subf %246, %268 : vector<2x1xf32>
    %cst_52 = arith.constant dense<0.000000e+00> : vector<1xf32>
    %270 = vector.multi_reduction <add>, %269, %cst_52 [0] : vector<2x1xf32> to vector<1xf32>
    %271 = vector.shape_cast %270 : vector<1xf32> to vector<1x1xf32>
    %cst_53 = arith.constant 2.000000e+00 : f32
    %272 = vector.broadcast %cst_53 : f32 to vector<1x1xf32>
    %273 = arith.divf %271, %272 : vector<1x1xf32>
    %274 = tpu.concatenate %217, %218 in 0 : vector<2x32xf32>, vector<2x32xf32> -> vector<4x32xf32>
    %275 = tpu.concatenate %215, %216 in 0 : vector<2x32xf32>, vector<2x32xf32> -> vector<4x32xf32>
    %cst_54 = arith.constant 0.000000e+00 : f32
    %276 = vector.broadcast %cst_54 : f32 to vector<16x96xf32>
    %277 = tpu.concatenate %214, %276 in 1 : vector<16x32xf32>, vector<16x96xf32> -> vector<16x128xf32>
    %cst_55 = arith.constant 0.000000e+00 : f32
    %278 = vector.broadcast %cst_55 : f32 to vector<4x64xf32>
    %279 = tpu.concatenate %274, %275, %278 in 1 : vector<4x32xf32>, vector<4x32xf32>, vector<4x64xf32> -> vector<4x128xf32>
    %cst_56 = arith.constant 0.000000e+00 : f32
    %280 = vector.broadcast %cst_56 : f32 to vector<2x126xf32>
    %281 = tpu.concatenate %237, %280 in 1 : vector<2x2xf32>, vector<2x126xf32> -> vector<2x128xf32>
    %cst_57 = arith.constant 0.000000e+00 : f32
    %282 = vector.broadcast %cst_57 : f32 to vector<1x127xf32>
    %283 = tpu.concatenate %273, %282 in 1 : vector<1x1xf32>, vector<1x127xf32> -> vector<1x128xf32>
    %cst_58 = arith.constant 0.000000e+00 : f32
    %284 = vector.broadcast %cst_58 : f32 to vector<1x128xf32>
    %285 = tpu.concatenate %277, %279, %281, %283, %284 in 0 : vector<16x128xf32>, vector<4x128xf32>, vector<2x128xf32>, vector<1x128xf32>, vector<1x128xf32> -> vector<24x128xf32>
    %c0_59 = arith.constant 0 : index
    %c0_60 = arith.constant 0 : index
    %286 = vector.load %arg3[%c0_59, %c0_60] : memref<24x128xf32, #tpu.memory_space<vmem>>, vector<24x128xf32>
    tpu.vector_store %arg3[%c0_59, %c0_60], %285 {strides = array<i32>} : memref<24x128xf32, #tpu.memory_space<vmem>>, vector<24x128xf32>,
    return
  }
}

</mosaic_0001>

<llo_original>
// kernel: model_with_multiple_loras_forward.1
$region0: #{model_with_multiple_loras_forward.1}
  #allocation0 [shape = 'u32[]', space=smem, size = 0x4, offset = 0x4, fixed_abs, tag = 'smem constant byte address 0x4 - core index']
  #allocation1 [shape = 'u32[72,128]{1,0:T(1,128)}', space=vmem, size = 0x9000, scoped, tag = 'internal scratch']
  %s0 = inlined_call_operand.vmem [shape: s32[18], index: 0, kind: input, shape index: {}]
  %s1 = inlined_call_operand.vmem [shape: f32[18], index: 1, kind: input, shape index: {}]
  %s2 = inlined_call_operand.hbm [shape: f32[152,128], index: 2, kind: input, shape index: {}]
  %s3 = inlined_call_operand.vmem [shape: f32[24,128], index: 3, kind: output, shape index: {}]
  %s4 = sld [smem:[#allocation0]]
  $region34: #{model_with_multiple_loras_forward.1} parent=0
    _
  %s6 = ssub.s32 1, %s4
  %s7 = scalar_select 0, %s6, %s4
  $region1: #{model_with_multiple_loras_forward.1} parent=0
    #allocation2 [shape = 'u8[512]{0}', space=smem, size = 0x200, scoped, tag = 'input window, operand 0, single buffered']
    #allocation3 [shape = 's32[1]{0}', space=sflag, size = 0x4, scoped, tag = 'scoped memory for model_with_multiple_loras_forward.1']
    #allocation4 [shape = 's32[1]{0}', space=sflag, size = 0x4, scoped, tag = 'scoped memory for model_with_multiple_loras_forward.1']
    #allocation5 [shape = 'u8[512]{0}', space=smem, size = 0x200, scoped, tag = 'input window, operand 1, single buffered']
    #allocation6 [shape = 's32[1]{0}', space=sflag, size = 0x4, scoped, tag = 'scoped memory for model_with_multiple_loras_forward.1']
    #allocation7 [shape = 'u8[77824]{0}', space=vmem, size = 0x13000, scoped, tag = 'input window, operand 2, single buffered']
    %8 = vsyncpa [#allocation4], 0
    %9 = vsyncpa [#allocation6], 0
    %10 = vsyncpa [#allocation3], 0
    // Predicated region
    $region2: #{model_with_multiple_loras_forward.1} parent=1 // pred_check
      _
    $region3: #{model_with_multiple_loras_forward.1} parent=1 // pred_check_branch
      %12 = sbr.rel (0) target = $region5
    $region4: #{model_with_multiple_loras_forward.1} parent=1 // pred_region
      %14 = vsyncadd [#allocation4], 0
      %s16 = sshll.u32 %s0, 4
      %s17 = int_to_ptr.vmem [resolvable:$true] %s16
      %19 = dma.vmem_to_smem %s17, 16, [#allocation2], [#allocation4]
    $region5: #{model_with_multiple_loras_forward.1} parent=1 // pred_fallthru
      _
    // Predicated region
    $region6: #{model_with_multiple_loras_forward.1} parent=1 // pred_check
      _
    $region7: #{model_with_multiple_loras_forward.1} parent=1 // pred_check_branch
      %21 = sbr.rel (0) target = $region9
    $region8: #{model_with_multiple_loras_forward.1} parent=1 // pred_region
      %23 = vsyncadd [#allocation6], 0
      %s25 = sshll.u32 %s1, 4
      %s26 = int_to_ptr.vmem [resolvable:$true] %s25
      %28 = dma.vmem_to_smem %s26, 16, [#allocation5], [#allocation6]
    $region9: #{model_with_multiple_loras_forward.1} parent=1 // pred_fallthru
      _
    // Predicated region
    $region10: #{model_with_multiple_loras_forward.1} parent=1 // pred_check
      _
    $region11: #{model_with_multiple_loras_forward.1} parent=1 // pred_check_branch
      %30 = sbr.rel (0) target = $region13
    $region12: #{model_with_multiple_loras_forward.1} parent=1 // pred_region
      %32 = vsyncadd [#allocation3], 0
      %s33 = sshll.u32 %s2, 4
      %s34 = int_to_ptr.hbm [resolvable:$true] %s33
      %s35 = sshll.u32 [#allocation7], 4
      %s36 = int_to_ptr.vmem [resolvable:$true] %s35
      %41 = dma.hbm_to_vmem [thread:$0]  %s34, 2432, %s36, [#allocation3], 128, 128, 8
    $region13: #{model_with_multiple_loras_forward.1} parent=1 // pred_fallthru
      _
    // Predicated region
    $region14: #{model_with_multiple_loras_forward.1} parent=1 // pred_check
      _
    $region15: #{model_with_multiple_loras_forward.1} parent=1 // pred_check_branch
      %43 = sbr.rel (0) target = $region17
    $region16: #{model_with_multiple_loras_forward.1} parent=1 // pred_region
      %45 = dma.done [#allocation4], 16
    $region17: #{model_with_multiple_loras_forward.1} parent=1 // pred_fallthru
      _
    // Predicated region
    $region18: #{model_with_multiple_loras_forward.1} parent=1 // pred_check
      _
    $region19: #{model_with_multiple_loras_forward.1} parent=1 // pred_check_branch
      %47 = sbr.rel (0) target = $region21
    $region20: #{model_with_multiple_loras_forward.1} parent=1 // pred_region
      %49 = dma.done [#allocation6], 16
    $region21: #{model_with_multiple_loras_forward.1} parent=1 // pred_fallthru
      _
    // Predicated region
    $region22: #{model_with_multiple_loras_forward.1} parent=1 // pred_check
      _
    $region23: #{model_with_multiple_loras_forward.1} parent=1 // pred_check_branch
      %51 = sbr.rel (0) target = $region25
    $region24: #{model_with_multiple_loras_forward.1} parent=1 // pred_region
      %53 = dma.done [#allocation3], 2432
    $region25: #{model_with_multiple_loras_forward.1} parent=1 // pred_fallthru
      _
    %54 = sfence
    %v55 = vlaneseq
    %v56 = vshrl.u32 %v55, 7
    %v57 = vadd.s32 %v56, 8
    %v58 = vadd.s32 %v56, 16
    %v59 = vlaneseq
    %v60 = vand.u32 %v59, 127
    %vm61 = vcmp.eq.s32.totalorder %v56, 0
    %vm62 = vcmp.eq.s32.totalorder %v57, 0
    %vm63 = vcmp.eq.s32.totalorder %v58, 0
    %s64 = sld [smem:[#allocation2]]
    %v65 = vstv %s64
    %vm66 = vcmp.eq.s32.totalorder %v60, %v65
    %vm67 = vmand %vm61, %vm66
    %vm68 = vmand %vm62, %vm66
    %vm69 = vmand %vm63, %vm66
    %s70 = sld [smem:[#allocation5]]
    %v71 = vstv %s70
    %v72 = vsel %vm67, %v71, 0.0
    %v73 = vsel %vm68, %v71, 0.0
    %v74 = vsel %vm69, %v71, 0.0
    %vm75 = vcmp.eq.s32.totalorder %v56, 1
    %vm76 = vcmp.eq.s32.totalorder %v57, 1
    %vm77 = vcmp.eq.s32.totalorder %v58, 1
    %s78 = sld [smem:[#allocation2 + $0x1]]
    %v79 = vstv %s78
    %vm80 = vcmp.eq.s32.totalorder %v60, %v79
    %vm81 = vmand %vm75, %vm80
    %vm82 = vmand %vm76, %vm80
    %vm83 = vmand %vm77, %vm80
    %s84 = sld [smem:[#allocation5 + $0x1]]
    %v85 = vstv %s84
    %v86 = vsel %vm81, %v85, %v72
    %v87 = vsel %vm82, %v85, %v73
    %v88 = vsel %vm83, %v85, %v74
    %vm89 = vcmp.eq.s32.totalorder %v56, 2
    %vm90 = vcmp.eq.s32.totalorder %v57, 2
    %vm91 = vcmp.eq.s32.totalorder %v58, 2
    %s92 = sld [smem:[#allocation2 + $0x2]]
    %v93 = vstv %s92
    %vm94 = vcmp.eq.s32.totalorder %v60, %v93
    %vm95 = vmand %vm89, %vm94
    %vm96 = vmand %vm90, %vm94
    %vm97 = vmand %vm91, %vm94
    %s98 = sld [smem:[#allocation5 + $0x2]]
    %v99 = vstv %s98
    %v100 = vsel %vm95, %v99, %v86
    %v101 = vsel %vm96, %v99, %v87
    %v102 = vsel %vm97, %v99, %v88
    %vm103 = vcmp.eq.s32.totalorder %v56, 3
    %vm104 = vcmp.eq.s32.totalorder %v57, 3
    %vm105 = vcmp.eq.s32.totalorder %v58, 3
    %s106 = sld [smem:[#allocation2 + $0x3]]
    %v107 = vstv %s106
    %vm108 = vcmp.eq.s32.totalorder %v60, %v107
    %vm109 = vmand %vm103, %vm108
    %vm110 = vmand %vm104, %vm108
    %vm111 = vmand %vm105, %vm108
    %s112 = sld [smem:[#allocation5 + $0x3]]
    %v113 = vstv %s112
    %v114 = vsel %vm109, %v113, %v100
    %v115 = vsel %vm110, %v113, %v101
    %v116 = vsel %vm111, %v113, %v102
    %vm117 = vcmp.eq.s32.totalorder %v56, 4
    %vm118 = vcmp.eq.s32.totalorder %v57, 4
    %vm119 = vcmp.eq.s32.totalorder %v58, 4
    %s120 = sld [smem:[#allocation2 + $0x4]]
    %v121 = vstv %s120
    %vm122 = vcmp.eq.s32.totalorder %v60, %v121
    %vm123 = vmand %vm117, %vm122
    %vm124 = vmand %vm118, %vm122
    %vm125 = vmand %vm119, %vm122
    %s126 = sld [smem:[#allocation5 + $0x4]]
    %v127 = vstv %s126
    %v128 = vsel %vm123, %v127, %v114
    %v129 = vsel %vm124, %v127, %v115
    %v130 = vsel %vm125, %v127, %v116
    %vm131 = vcmp.eq.s32.totalorder %v56, 5
    %vm132 = vcmp.eq.s32.totalorder %v57, 5
    %vm133 = vcmp.eq.s32.totalorder %v58, 5
    %s134 = sld [smem:[#allocation2 + $0x5]]
    %v135 = vstv %s134
    %vm136 = vcmp.eq.s32.totalorder %v60, %v135
    %vm137 = vmand %vm131, %vm136
    %vm138 = vmand %vm132, %vm136
    %vm139 = vmand %vm133, %vm136
    %s140 = sld [smem:[#allocation5 + $0x5]]
    %v141 = vstv %s140
    %v142 = vsel %vm137, %v141, %v128
    %v143 = vsel %vm138, %v141, %v129
    %v144 = vsel %vm139, %v141, %v130
    %vm145 = vcmp.eq.s32.totalorder %v56, 6
    %vm146 = vcmp.eq.s32.totalorder %v57, 6
    %vm147 = vcmp.eq.s32.totalorder %v58, 6
    %s148 = sld [smem:[#allocation2 + $0x6]]
    %v149 = vstv %s148
    %vm150 = vcmp.eq.s32.totalorder %v60, %v149
    %vm151 = vmand %vm145, %vm150
    %vm152 = vmand %vm146, %vm150
    %vm153 = vmand %vm147, %vm150
    %s154 = sld [smem:[#allocation5 + $0x6]]
    %v155 = vstv %s154
    %v156 = vsel %vm151, %v155, %v142
    %v157 = vsel %vm152, %v155, %v143
    %v158 = vsel %vm153, %v155, %v144
    %vm159 = vcmp.eq.s32.totalorder %v56, 7
    %vm160 = vcmp.eq.s32.totalorder %v57, 7
    %vm161 = vcmp.eq.s32.totalorder %v58, 7
    %s162 = sld [smem:[#allocation2 + $0x7]]
    %v163 = vstv %s162
    %vm164 = vcmp.eq.s32.totalorder %v60, %v163
    %vm165 = vmand %vm159, %vm164
    %vm166 = vmand %vm160, %vm164
    %vm167 = vmand %vm161, %vm164
    %s168 = sld [smem:[#allocation5 + $0x7]]
    %v169 = vstv %s168
    %v170 = vsel %vm165, %v169, %v156
    %v171 = vsel %vm166, %v169, %v157
    %v172 = vsel %vm167, %v169, %v158
    %vm173 = vcmp.eq.s32.totalorder %v56, 8
    %vm174 = vcmp.eq.s32.totalorder %v57, 8
    %vm175 = vcmp.eq.s32.totalorder %v58, 8
    %s176 = sld [smem:[#allocation2 + $0x8]]
    %v177 = vstv %s176
    %vm178 = vcmp.eq.s32.totalorder %v60, %v177
    %vm179 = vmand %vm173, %vm178
    %vm180 = vmand %vm174, %vm178
    %vm181 = vmand %vm175, %vm178
    %s182 = sld [smem:[#allocation5 + $0x8]]
    %v183 = vstv %s182
    %v184 = vsel %vm179, %v183, %v170
    %v185 = vsel %vm180, %v183, %v171
    %v186 = vsel %vm181, %v183, %v172
    %vm187 = vcmp.eq.s32.totalorder %v56, 9
    %vm188 = vcmp.eq.s32.totalorder %v57, 9
    %vm189 = vcmp.eq.s32.totalorder %v58, 9
    %s190 = sld [smem:[#allocation2 + $0x9]]
    %v191 = vstv %s190
    %vm192 = vcmp.eq.s32.totalorder %v60, %v191
    %vm193 = vmand %vm187, %vm192
    %vm194 = vmand %vm188, %vm192
    %vm195 = vmand %vm189, %vm192
    %s196 = sld [smem:[#allocation5 + $0x9]]
    %v197 = vstv %s196
    %v198 = vsel %vm193, %v197, %v184
    %v199 = vsel %vm194, %v197, %v185
    %v200 = vsel %vm195, %v197, %v186
    %vm201 = vcmp.eq.s32.totalorder %v56, 10
    %vm202 = vcmp.eq.s32.totalorder %v57, 10
    %vm203 = vcmp.eq.s32.totalorder %v58, 10
    %s204 = sld [smem:[#allocation2 + $0xa]]
    %v205 = vstv %s204
    %vm206 = vcmp.eq.s32.totalorder %v60, %v205
    %vm207 = vmand %vm201, %vm206
    %vm208 = vmand %vm202, %vm206
    %vm209 = vmand %vm203, %vm206
    %s210 = sld [smem:[#allocation5 + $0xa]]
    %v211 = vstv %s210
    %v212 = vsel %vm207, %v211, %v198
    %v213 = vsel %vm208, %v211, %v199
    %v214 = vsel %vm209, %v211, %v200
    %vm215 = vcmp.eq.s32.totalorder %v56, 11
    %vm216 = vcmp.eq.s32.totalorder %v57, 11
    %vm217 = vcmp.eq.s32.totalorder %v58, 11
    %s218 = sld [smem:[#allocation2 + $0xb]]
    %v219 = vstv %s218
    %vm220 = vcmp.eq.s32.totalorder %v60, %v219
    %vm221 = vmand %vm215, %vm220
    %vm222 = vmand %vm216, %vm220
    %vm223 = vmand %vm217, %vm220
    %s224 = sld [smem:[#allocation5 + $0xb]]
    %v225 = vstv %s224
    %v226 = vsel %vm221, %v225, %v212
    %v227 = vsel %vm222, %v225, %v213
    %v228 = vsel %vm223, %v225, %v214
    %vm229 = vcmp.eq.s32.totalorder %v56, 12
    %vm230 = vcmp.eq.s32.totalorder %v57, 12
    %vm231 = vcmp.eq.s32.totalorder %v58, 12
    %s232 = sld [smem:[#allocation2 + $0xc]]
    %v233 = vstv %s232
    %vm234 = vcmp.eq.s32.totalorder %v60, %v233
    %vm235 = vmand %vm229, %vm234
    %vm236 = vmand %vm230, %vm234
    %vm237 = vmand %vm231, %vm234
    %s238 = sld [smem:[#allocation5 + $0xc]]
    %v239 = vstv %s238
    %v240 = vsel %vm235, %v239, %v226
    %v241 = vsel %vm236, %v239, %v227
    %v242 = vsel %vm237, %v239, %v228
    %vm243 = vcmp.eq.s32.totalorder %v56, 13
    %vm244 = vcmp.eq.s32.totalorder %v57, 13
    %vm245 = vcmp.eq.s32.totalorder %v58, 13
    %s246 = sld [smem:[#allocation2 + $0xd]]
    %v247 = vstv %s246
    %vm248 = vcmp.eq.s32.totalorder %v60, %v247
    %vm249 = vmand %vm243, %vm248
    %vm250 = vmand %vm244, %vm248
    %vm251 = vmand %vm245, %vm248
    %s252 = sld [smem:[#allocation5 + $0xd]]
    %v253 = vstv %s252
    %v254 = vsel %vm249, %v253, %v240
    %v255 = vsel %vm250, %v253, %v241
    %v256 = vsel %vm251, %v253, %v242
    %vm257 = vcmp.eq.s32.totalorder %v56, 14
    %vm258 = vcmp.eq.s32.totalorder %v57, 14
    %vm259 = vcmp.eq.s32.totalorder %v58, 14
    %s260 = sld [smem:[#allocation2 + $0xe]]
    %v261 = vstv %s260
    %vm262 = vcmp.eq.s32.totalorder %v60, %v261
    %vm263 = vmand %vm257, %vm262
    %vm264 = vmand %vm258, %vm262
    %vm265 = vmand %vm259, %vm262
    %s266 = sld [smem:[#allocation5 + $0xe]]
    %v267 = vstv %s266
    %v268 = vsel %vm263, %v267, %v254
    %v269 = vsel %vm264, %v267, %v255
    %v270 = vsel %vm265, %v267, %v256
    %vm271 = vcmp.eq.s32.totalorder %v56, 15
    %vm272 = vcmp.eq.s32.totalorder %v57, 15
    %vm273 = vcmp.eq.s32.totalorder %v58, 15
    %s274 = sld [smem:[#allocation2 + $0xf]]
    %v275 = vstv %s274
    %vm276 = vcmp.eq.s32.totalorder %v60, %v275
    %vm277 = vmand %vm271, %vm276
    %vm278 = vmand %vm272, %vm276
    %vm279 = vmand %vm273, %vm276
    %s280 = sld [smem:[#allocation5 + $0xf]]
    %v281 = vstv %s280
    %v282 = vsel %vm277, %v281, %v268
    %v283 = vsel %vm278, %v281, %v269
    %v284 = vsel %vm279, %v281, %v270
    %vm285 = vcmp.eq.s32.totalorder %v56, 16
    %vm286 = vcmp.eq.s32.totalorder %v57, 16
    %vm287 = vcmp.eq.s32.totalorder %v58, 16
    %vm288 = vmand %vm285, %vm66
    %vm289 = vmand %vm286, %vm66
    %vm290 = vmand %vm287, %vm66
    %v291 = vsel %vm288, %v71, %v282
    %v292 = vsel %vm289, %v71, %v283
    %v293 = vsel %vm290, %v71, %v284
    %vm294 = vcmp.eq.s32.totalorder %v56, 17
    %vm295 = vcmp.eq.s32.totalorder %v57, 17
    %vm296 = vcmp.eq.s32.totalorder %v58, 17
    %vm297 = vmand %vm294, %vm178
    %vm298 = vmand %vm295, %vm178
    %vm299 = vmand %vm296, %vm178
    %v300 = vsel %vm297, %v183, %v291
    %v301 = vsel %vm298, %v183, %v292
    %v302 = vsel %vm299, %v183, %v293
    %v303 = vld [vmem:[#allocation7] sm:$0xff]
    %v304 = vld [vmem:[#allocation7 + $0x8] sm:$0xff]
    %v305 = vld [vmem:[#allocation7 + $0x10] sm:$0xff]
    %v306 = vld [vmem:[#allocation7 + $0x18] sm:$0xff]
    %v307 = vld [vmem:[#allocation7 + $0x20] sm:$0xff]
    %v308 = vld [vmem:[#allocation7 + $0x28] sm:$0xff]
    %v309 = vld [vmem:[#allocation7 + $0x30] sm:$0x3]
    %vm310 = vcmask 408576
    %v312 = vsel %vm310, %v300, 0
    %v315 = vsel %vm310, %v301, 0
    %v318 = vsel %vm310, %v302, 0
    %vm320 = vcmask 1041408
    %v322 = vsel %vm320, %v309, 0
    %324 = vmatpush.msra.mxu0 0.0
    %325 = vmatpush.msra.mxu0 0.0
    %326 = vmatpush.msra.mxu0 0.0
    %327 = vmatpush.msra.mxu0 0.0
    %328 = vmatpush.msra.mxu0 0.0
    %329 = vmatpush.msra.mxu0 0.0
    %330 = vmatpush.msra.mxu0 0.0
    %331 = vmatpush.msra.mxu0 0.0
    %332 = vmatpush.msra.mxu0 0.0
    %333 = vmatpush.msra.mxu0 %v322
    %334 = vmatpush.msra.mxu0 %v308
    %335 = vmatpush.msra.mxu0 %v307
    %336 = vmatpush.msra.mxu0 %v306
    %337 = vmatpush.msra.mxu0 %v305
    %338 = vmatpush.msra.mxu0 %v304
    %339 = vmatpush.msra.mxu0 %v303
    %340 = vmatmul.f32.gmra.mxu0 %v312
    %v341 = vpop.f32.mrf.mxu0
    %v342 = vadd.f32 0.0, %v341
    %343 = vmatmul.f32.gmra.mxu0 %v315
    %v344 = vpop.f32.mrf.mxu0
    %v345 = vadd.f32 0.0, %v344
    %346 = vmatmul.f32.gmra.mxu0 %v318
    %v347 = vpop.f32.mrf.mxu0
    %v348 = vadd.f32 0.0, %v347
    %349 = vdwg.mxu0
    %s350 = sld [smem:[#allocation5 + $0x10]]
    %s351 = sld [smem:[#allocation5 + $0x11]]
    %s352 = sadd.f32 %s350, %s351
    %vm353 = vcmp.ge.s32.totalorder %v60, 0
    %vm354 = vcmp.lt.s32.totalorder %v60, 8
    %vm355 = vmand %vm353, %vm354
    %vm356 = vcmp.ge.s32.totalorder %v60, 8
    %vm357 = vcmp.lt.s32.totalorder %v60, 16
    %vm358 = vmand %vm356, %vm357
    %v359 = vstv %s350
    %v360 = vsel %vm355, %v359, 0.0
    %v361 = vstv %s351
    %v362 = vsel %vm358, %v361, %v360
    %364 = vrot.lane.b32.xlu0 %v362, 32
    %v365 = vpop.permute.xlu0 %364
    %v367 = vmul.f32 %v342, %v365
    %v368 = vmul.f32 %v345, %v365
    %v369 = vsel %vm355, 1, 0
    %vm370 = vcmp.eq.s32.totalorder %v369, 1
    %372 = vrot.lane.b32.xlu0 %v348, 96
    %v373 = vpop.permute.xlu0 %372
    %v375 = vsel %vm370, %v373, 0.0
    %v376 = vsel %vm358, 1, 0
    %vm377 = vcmp.eq.s32.totalorder %v376, 1
    %v378 = vsel %vm377, %v373, 0.0
    %380 = vrot.lane.b32.xlu0 %v375, 32
    %v381 = vpop.permute.xlu0 %380
    %v384 = vrot.slane %v378, 6
    %385 = vrot.lane.b32.xlu0 %v384, 32
    %v386 = vpop.permute.xlu0 %385
    %v388 = vsel %vm320, %v381, %v386
    %v389 = vld [vmem:[#allocation7 + $0x38] sm:$0xff]
    %v390 = vld [vmem:[#allocation7 + $0x40] sm:$0xff]
    %394 = vrot.lane.b32.xlu0 %v367, 96
    %v395 = vpop.permute.xlu0 %394
    %396 = vrot.lane.b32.xlu0 %v368, 96
    %v397 = vpop.permute.xlu0 %396
    %398 = vrot.lane.b32.xlu0 %v388, 96
    %v399 = vpop.permute.xlu0 %398
    %vm400 = vcmask 130048
    %v401 = vsel %vm400, %v395, 0
    %v403 = vsel %vm400, %v397, 0
    %v405 = vsel %vm400, %v399, 0
    %407 = vmatpush.msra.mxu0 0.0
    %408 = vmatpush.msra.mxu0 0.0
    %409 = vmatpush.msra.mxu0 0.0
    %410 = vmatpush.msra.mxu0 0.0
    %411 = vmatpush.msra.mxu0 0.0
    %412 = vmatpush.msra.mxu0 0.0
    %413 = vmatpush.msra.mxu0 0.0
    %414 = vmatpush.msra.mxu0 0.0
    %415 = vmatpush.msra.mxu0 0.0
    %416 = vmatpush.msra.mxu0 0.0
    %417 = vmatpush.msra.mxu0 0.0
    %418 = vmatpush.msra.mxu0 0.0
    %419 = vmatpush.msra.mxu0 0.0
    %420 = vmatpush.msra.mxu0 0.0
    %421 = vmatpush.msra.mxu0 %v390
    %422 = vmatpush.msra.mxu0 %v389
    %423 = vmatmul.f32.gmra.mxu0 %v401
    %v424 = vpop.f32.mrf.mxu0
    %v425 = vadd.f32 0.0, %v424
    %426 = vmatmul.f32.gmra.mxu0 %v403
    %v427 = vpop.f32.mrf.mxu0
    %v428 = vadd.f32 0.0, %v427
    %429 = vmatmul.f32.gmra.mxu0 %v405
    %v430 = vpop.f32.mrf.mxu0
    %v431 = vadd.f32 0.0, %v430
    %432 = vdwg.mxu0
    %v433 = vstv %s352
    %v434 = vmul.f32 %v433, %v342
    %v435 = vmul.f32 %v433, %v345
    %v436 = vadd.f32 %v434, %v425
    %v437 = vadd.f32 %v435, %v428
    %v438 = vadd.f32 %v348, %v431
    %v440 = vrot.slane %v431, 2
    %v442 = vadd.f32 %v348, %v440
    %v443 = vmul.f32 %v433, %v348
    %v444 = vmul.f32 %v359, %v431
    %v445 = vadd.f32 %v443, %v444
    %v446 = vmul.f32 %v361, %v431
    %v448 = vrot.slane %v446, 2
    %v450 = vadd.f32 %v445, %v448
    %v451 = vld [vmem:[#allocation7 + $0x48] sm:$0xff]
    %v452 = vld [vmem:[#allocation7 + $0x50] sm:$0xff]
    %v453 = vld [vmem:[#allocation7 + $0x58] sm:$0xff]
    %v454 = vld [vmem:[#allocation7 + $0x60] sm:$0xff]
    %v455 = vld [vmem:[#allocation7 + $0x88] sm:$0x1]
    %v456 = vld [vmem:[#allocation7 + $0x68] sm:$0xff]
    %v457 = vld [vmem:[#allocation7 + $0x70] sm:$0xff]
    %v458 = vld [vmem:[#allocation7 + $0x78] sm:$0xff]
    %v459 = vld [vmem:[#allocation7 + $0x80] sm:$0xff]
    %v460 = vld [vmem:[#allocation7 + $0x90] sm:$0x1]
    %v461 = vperm.slane %v455, 0
    %vm462 = vcmask 261120
    %v464 = vsel %vm462, %v450, 0
    %466 = vmatpush.msra.mxu0 0.0
    %467 = vmatpush.msra.mxu0 0.0
    %468 = vmatpush.msra.mxu0 0.0
    %469 = vmatpush.msra.mxu0 0.0
    %470 = vmatpush.msra.mxu0 0.0
    %471 = vmatpush.msra.mxu0 0.0
    %472 = vmatpush.msra.mxu0 0.0
    %473 = vmatpush.msra.mxu0 0.0
    %474 = vmatpush.msra.mxu0 0.0
    %475 = vmatpush.msra.mxu0 0.0
    %476 = vmatpush.msra.mxu0 0.0
    %477 = vmatpush.msra.mxu0 0.0
    %478 = vmatpush.msra.mxu0 %v454
    %479 = vmatpush.msra.mxu0 %v453
    %480 = vmatpush.msra.mxu0 %v452
    %481 = vmatpush.msra.mxu0 %v451
    %482 = vmatmul.f32.gmra.mxu0 %v464
    %v483 = vpop.f32.mrf.mxu0
    %v484 = vadd.f32 %v461, %v483
    %485 = vdwg.mxu0
    %v486 = vtanh.pop %v484
    %v487 = vperm.slane %v460, 0
    %v489 = vsel %vm462, %v486, 0
    %491 = vmatpush.msra.mxu0 0.0
    %492 = vmatpush.msra.mxu0 0.0
    %493 = vmatpush.msra.mxu0 0.0
    %494 = vmatpush.msra.mxu0 0.0
    %495 = vmatpush.msra.mxu0 0.0
    %496 = vmatpush.msra.mxu0 0.0
    %497 = vmatpush.msra.mxu0 0.0
    %498 = vmatpush.msra.mxu0 0.0
    %499 = vmatpush.msra.mxu0 0.0
    %500 = vmatpush.msra.mxu0 0.0
    %501 = vmatpush.msra.mxu0 0.0
    %502 = vmatpush.msra.mxu0 0.0
    %503 = vmatpush.msra.mxu0 %v459
    %504 = vmatpush.msra.mxu0 %v458
    %505 = vmatpush.msra.mxu0 %v457
    %506 = vmatpush.msra.mxu0 %v456
    %507 = vmatmul.f32.gmra.mxu0 %v489
    %v508 = vpop.f32.mrf.mxu0
    %v509 = vadd.f32 %v487, %v508
    %510 = vdwg.mxu0
    %vm511 = vcmask 9216
    %v512 = vsel %vm511, %v509, -inf
    %513 = vmax.xlane.f32.xlu0 %v512
    %v514 = vpop.xlane.xlu0 %513
    %v515 = vsub.f32 %v509, %v514
    %v516 = vmul.f32 %v515, 1.442695
    %v517 = vpow.pop %v516
    %v518 = vsel %vm511, %v517, 0.0
    %519 = vadd.xlane.f32.xlu0 %v518
    %v520 = vpop.xlane.xlu0 %519
    %v521 = vlog2.pop %v520
    %v522 = vmul.f32 %v521, 0.6931472
    %v523 = vadd.f32 %v514, %v522
    %s524 = sld [smem:[#allocation2 + $0x10]]
    %v525 = vstv %s524
    %vm526 = vcmp.eq.s32.totalorder %v60, %v525
    %vm527 = vmand %vm61, %vm526
    %v528 = vsel %vm527, 1.0, 0.0
    %s529 = sld [smem:[#allocation2 + $0x11]]
    %v530 = vstv %s529
    %vm531 = vcmp.eq.s32.totalorder %v60, %v530
    %vm532 = vmand %vm75, %vm531
    %v533 = vsel %vm532, 1.0, %v528
    %v534 = vmul.f32 %v533, %v509
    %v535 = vsel %vm511, %v534, 0.0
    %536 = vadd.xlane.f32.xlu0 %v535
    %v537 = vpop.xlane.xlu0 %536
    %v538 = vsub.f32 %v523, %v537
    %v539 = vsel %vm320, %v538, 0.0
    %v540 = vrot.slane %v539, 4
    %v541 = vadd.f32 %v539, %v540
    %v542 = vrot.slane %v541, 2
    %v543 = vadd.f32 %v541, %v542
    %v544 = vrot.slane %v543, 1
    %v545 = vadd.f32 %v543, %v544
    %v546 = vrcp.pop 2.0
    %v547 = vmul.f32 2.0, %v546
    %v548 = vsub.f32 1.0, %v547
    %v549 = vmul.f32 %v546, %v548
    %v550 = vadd.f32 %v546, %v549
    %vm551 = vweird.f32 %v546
    %v552 = vsel %vm551, %v546, %v550
    %v553 = vmul.f32 %v545, %v552
    %v555 = vrot.slane %v442, 6
    %v557 = vsel %vm320, %v438, %v555
    %v558 = vsel %vm462, %v436, 0.0
    %v559 = vsel %vm462, %v437, 0.0
    %560 = vrot.lane.b32.xlu0 %v431, 32
    %v561 = vpop.permute.xlu0 %560
    %v563 = vsel %vm462, %v557, %v561
    %vm564 = vcmask 523264
    %v565 = vsel %vm564, %v563, 0.0
    %vm566 = vcmask 15360
    %v567 = vsel %vm566, %v509, 0.0
    %vm568 = vcmask 7168
    %v569 = vsel %vm568, %v553, 0.0
    %v571 = vrot.slane %v567, 4
    %v574 = vrot.slane %v569, 2
    %vm576 = vcmask 1043456
    %v577 = vsel %vm576, %v565, %v571
    %vm578 = vcmask 1045504
    %v579 = vsel %vm578, %v577, %v574
    %vm580 = vcmask 1046528
    %v581 = vsel %vm580, %v579, 0.0
    %582 = vst [vmem:[%s3] sm:$0xff] %v558
    %583 = vst [vmem:[%s3 + $0x8] sm:$0xff] %v559
    %584 = vst [vmem:[%s3 + $0x10] sm:$0xff] %v581
    // Predicated region
    $region26: #{model_with_multiple_loras_forward.1} parent=1 // pred_check
      _
    $region27: #{model_with_multiple_loras_forward.1} parent=1 // pred_check_branch
      %586 = sbr.rel (0) target = $region29
    $region28: #{model_with_multiple_loras_forward.1} parent=1 // pred_region
      _
    $region29: #{model_with_multiple_loras_forward.1} parent=1 // pred_fallthru
      _
    // Predicated region
    $region30: #{model_with_multiple_loras_forward.1} parent=1 // pred_check
      _
    $region31: #{model_with_multiple_loras_forward.1} parent=1 // pred_check_branch
      %588 = sbr.rel (0) target = $region33
    $region32: #{model_with_multiple_loras_forward.1} parent=1 // pred_region
      _
    $region33: #{model_with_multiple_loras_forward.1} parent=1 // pred_fallthru
      _
    %589 = vsyncpa [#allocation3], 1
    %590 = vsyncpa [#allocation4], 1
    %591 = vsyncpa [#allocation6], 1

</llo_original>
